<compile_context>
chip_gen: v5e
topology: v5e:2x2
jax: 0.10.0
libtpu: 0.0.40
codegen_flags: <defaults>
</compile_context>

<pallas_src>
import functools

import jax
import jax.numpy as jnp
from jax.experimental import pallas as pl
from jax.experimental.pallas import tpu as pltpu

HIDDEN = 256
HEAD_PAD = 128  # lane-dense head width (true head width is 1)


def _round_up(x: int, m: int) -> int:
    return ((x + m - 1) // m) * m


def critic_kernel(s_ref, a_ref, w1s_ref, w1a_ref, b1_ref, w2_ref, b2_ref,
                  w3_ref, b3_ref, o_ref):
    # h1 = relu(state @ W1_s + action @ W1_a + b1) -- concat folded into W1 split
    h1 = (jnp.dot(s_ref[...], w1s_ref[...], preferred_element_type=jnp.float32)
          + jnp.dot(a_ref[...], w1a_ref[...], preferred_element_type=jnp.float32)
          + b1_ref[...])
    h1 = jnp.maximum(h1, 0.0)
    # h2 = relu(h1 @ W2 + b2)
    h2 = jnp.dot(h1, w2_ref[...], preferred_element_type=jnp.float32) + b2_ref[...]
    h2 = jnp.maximum(h2, 0.0)
    # q (lane-dense padded head): (TB, 128), only column 0 is meaningful
    q = jnp.dot(h2, w3_ref[...], preferred_element_type=jnp.float32) + b3_ref[...]
    o_ref[...] = q.astype(o_ref.dtype)


@functools.partial(jax.jit, static_argnames=("tile_b",))
def critic_forward(state, action, params, tile_b: int = 256):
    """state: (B, state_dim), action: (B, action_dim) -> (B, 1)"""
    w1, b1, w2, b2, w3, b3 = params
    B, state_dim = state.shape
    action_dim = action.shape[1]

    # Split W1 so the kernel never needs a concatenated (B, D) activation.
    w1s = w1[:state_dim]          # (state_dim, 256)
    w1a = w1[state_dim:]          # (action_dim, 256)

    # Lane-dense head: pad the N=1 head to 128 output lanes (weight-only op).
    w3p = jnp.pad(w3, ((0, 0), (0, HEAD_PAD - w3.shape[1])))   # (256, 128)
    b3p = jnp.pad(b3, ((0, 0), (0, HEAD_PAD - b3.shape[1])))   # (1, 128)

    # Batch tiling: TB rows per grid step, batch padded up to a multiple of TB.
    TB = min(tile_b, _round_up(B, 8))
    Bp = _round_up(B, TB)
    if Bp != B:
        state = jnp.pad(state, ((0, Bp - B), (0, 0)))
        action = jnp.pad(action, ((0, Bp - B), (0, 0)))

    grid = (Bp // TB,)

    out = pl.pallas_call(
        critic_kernel,
        out_shape=jax.ShapeDtypeStruct((Bp, HEAD_PAD), jnp.float32),
        grid_spec=pltpu.PrefetchScalarGridSpec(
            num_scalar_prefetch=0,
            grid=grid,
            in_specs=[
                # activations: tiled along the batch axis
                pl.BlockSpec((TB, state_dim), lambda i: (i, 0)),
                pl.BlockSpec((TB, action_dim), lambda i: (i, 0)),
                # weights/biases: full blocks, constant index -> resident in VMEM
                pl.BlockSpec(w1s.shape, lambda i: (0, 0)),
                pl.BlockSpec(w1a.shape, lambda i: (0, 0)),
                pl.BlockSpec(b1.shape, lambda i: (0, 0)),
                pl.BlockSpec(w2.shape, lambda i: (0, 0)),
                pl.BlockSpec(b2.shape, lambda i: (0, 0)),
                pl.BlockSpec(w3p.shape, lambda i: (0, 0)),
                pl.BlockSpec(b3p.shape, lambda i: (0, 0)),
            ],
            out_specs=pl.BlockSpec((TB, HEAD_PAD), lambda i: (i, 0)),
        ),
        compiler_params=pltpu.CompilerParams(
            dimension_semantics=("parallel",)),
    )(state, action, w1s, w1a, b1, w2, b2, w3p, b3p)

    # Drop batch padding and the 127 padded head lanes.
    return out[:B, :1]


def init_critic_params(key, state_dim, action_dim, init_w=0.003):
    """Deterministic init mirroring the PyTorch module's shapes.

    net = Linear(state_dim+action_dim, 256) -> ReLU
        -> Linear(256, 256) -> ReLU
        -> Linear(256, 1)     (head, uniform(-init_w, init_w) like weights_init)

    Weights are stored transposed: (in_features, out_features).
    Biases are stored as (1, out_features) so they broadcast in-kernel.
    """
    d_in = state_dim + action_dim
    k1, k2, k3, k4, k5, k6 = jax.random.split(key, 6)

    def uni(k, shape, bound):
        return jax.random.uniform(k, shape, jnp.float32, -bound, bound)

    # PyTorch default Linear init: U(-1/sqrt(fan_in), 1/sqrt(fan_in))
    w1 = uni(k1, (d_in, HIDDEN), 1.0 / jnp.sqrt(d_in))
    b1 = uni(k2, (1, HIDDEN), 1.0 / jnp.sqrt(d_in))
    w2 = uni(k3, (HIDDEN, HIDDEN), 1.0 / jnp.sqrt(HIDDEN))
    b2 = uni(k4, (1, HIDDEN), 1.0 / jnp.sqrt(HIDDEN))
    # head: weights_init with init_w
    w3 = uni(k5, (HIDDEN, 1), init_w)
    b3 = uni(k6, (1, 1), init_w)
    return (w1, b1, w2, b2, w3, b3)


def critic_reference(state, action, params):
    """Pure-JAX reference for correctness check (matches PyTorch forward)."""
    w1, b1, w2, b2, w3, b3 = params
    sa = jnp.concatenate([state, action], axis=1)
    h1 = jnp.maximum(sa @ w1 + b1, 0.0)
    h2 = jnp.maximum(h1 @ w2 + b2, 0.0)
    return h2 @ w3 + b3


if __name__ == "__main__":
    key = jax.random.PRNGKey(0)
    k_params, k_state, k_action, k_state2, k_action2 = jax.random.split(key, 5)

    batch, state_dim, action_dim = 8, 16, 8
    params = init_critic_params(k_params, state_dim, action_dim, init_w=0.003)

    # Small, single-tile case.
    state = jax.random.normal(k_state, (batch, state_dim), jnp.float32)
    action = jax.random.normal(k_action, (batch, action_dim), jnp.float32)
    q = jax.block_until_ready(critic_forward(state, action, params))
    q_ref = critic_reference(state, action, params)
    assert q.shape == (batch, 1), q.shape
    assert jnp.allclose(q, q_ref, atol=1e-4, rtol=1e-4), (q, q_ref)

    # Larger batch: exercises multi-step grid + batch padding path.
    batch2 = 300
    state2 = jax.random.normal(k_state2, (batch2, state_dim), jnp.float32)
    action2 = jax.random.normal(k_action2, (batch2, action_dim), jnp.float32)
    q2 = jax.block_until_ready(critic_forward(state2, action2, params))
    q2_ref = critic_reference(state2, action2, params)
    assert q2.shape == (batch2, 1), q2.shape
    assert jnp.allclose(q2, q2_ref, atol=1e-4, rtol=1e-4), (q2, q2_ref)

    print("KERNEL_OK")
</pallas_src>

<mosaic_0001>
module attributes {stable_mosaic.version = 11 : i64} {
  func.func @critic_kernel(%arg0: i32, %arg1: memref<8x16xf32, #tpu.memory_space<vmem>>, %arg2: memref<8x8xf32, #tpu.memory_space<vmem>>, %arg3: memref<16x256xf32, #tpu.memory_space<vmem>>, %arg4: memref<8x256xf32, #tpu.memory_space<vmem>>, %arg5: memref<1x256xf32, #tpu.memory_space<vmem>>, %arg6: memref<256x256xf32, #tpu.memory_space<vmem>>, %arg7: memref<1x256xf32, #tpu.memory_space<vmem>>, %arg8: memref<256x128xf32, #tpu.memory_space<vmem>>, %arg9: memref<1x128xf32, #tpu.memory_space<vmem>>, %arg10: memref<8x128xf32, #tpu.memory_space<vmem>>) attributes {dimension_semantics = [#tpu.dimension_semantics<parallel>], iteration_bounds = array<i64: 1>, scalar_prefetch = 0 : i64, scratch_operands = 0 : i64, tpu.core_type = #tpu.core_type<tc>, window_params = [{transform_indices = @transform_0, window_bounds = array<i64: 8, 16>}, {transform_indices = @transform_1, window_bounds = array<i64: 8, 8>}, {pipeline_mode = #tpu.pipeline_mode<synchronous>, transform_indices = @transform_2, window_bounds = array<i64: 16, 256>}, {pipeline_mode = #tpu.pipeline_mode<synchronous>, transform_indices = @transform_3, window_bounds = array<i64: 8, 256>}, {pipeline_mode = #tpu.pipeline_mode<synchronous>, transform_indices = @transform_4, window_bounds = array<i64: 1, 256>}, {pipeline_mode = #tpu.pipeline_mode<synchronous>, transform_indices = @transform_5, window_bounds = array<i64: 256, 256>}, {pipeline_mode = #tpu.pipeline_mode<synchronous>, transform_indices = @transform_6, window_bounds = array<i64: 1, 256>}, {pipeline_mode = #tpu.pipeline_mode<synchronous>, transform_indices = @transform_7, window_bounds = array<i64: 256, 128>}, {pipeline_mode = #tpu.pipeline_mode<synchronous>, transform_indices = @transform_8, window_bounds = array<i64: 1, 128>}, {transform_indices = @transform_9, window_bounds = array<i64: 8, 128>}]} {
    %c0 = arith.constant 0 : index
    %c0_0 = arith.constant 0 : index
    %0 = vector.load %arg1[%c0, %c0_0] : memref<8x16xf32, #tpu.memory_space<vmem>>, vector<8x16xf32>
    %c0_1 = arith.constant 0 : index
    %c0_2 = arith.constant 0 : index
    %1 = vector.load %arg3[%c0_1, %c0_2] : memref<16x256xf32, #tpu.memory_space<vmem>>, vector<16x256xf32>
    %cst = arith.constant dense<0.000000e+00> : vector<8x256xf32>
    %2 = tpu.matmul %0, %1, %cst {dimension_numbers = #tpu.dot_dimension_numbers<[1], [0], [0], [1], [0, 0, 1, 1], [], []>} : vector<8x16xf32>, vector<16x256xf32>, vector<8x256xf32> -> vector<8x256xf32>
    %c0_3 = arith.constant 0 : index
    %c0_4 = arith.constant 0 : index
    %3 = vector.load %arg2[%c0_3, %c0_4] : memref<8x8xf32, #tpu.memory_space<vmem>>, vector<8x8xf32>
    %c0_5 = arith.constant 0 : index
    %c0_6 = arith.constant 0 : index
    %4 = vector.load %arg4[%c0_5, %c0_6] : memref<8x256xf32, #tpu.memory_space<vmem>>, vector<8x256xf32>
    %cst_7 = arith.constant dense<0.000000e+00> : vector<8x256xf32>
    %5 = tpu.matmul %3, %4, %cst_7 {dimension_numbers = #tpu.dot_dimension_numbers<[1], [0], [0], [1], [0, 0, 1, 1], [], []>} : vector<8x8xf32>, vector<8x256xf32>, vector<8x256xf32> -> vector<8x256xf32>
    %6 = arith.addf %2, %5 : vector<8x256xf32>
    %c0_8 = arith.constant 0 : index
    %c0_9 = arith.constant 0 : index
    %7 = vector.load %arg5[%c0_8, %c0_9] : memref<1x256xf32, #tpu.memory_space<vmem>>, vector<1x256xf32>
    %8 = vector.broadcast %7 : vector<1x256xf32> to vector<8x256xf32>
    %9 = arith.addf %6, %8 : vector<8x256xf32>
    %cst_10 = arith.constant 0.000000e+00 : f32
    %10 = vector.broadcast %cst_10 : f32 to vector<8x256xf32>
    %11 = arith.maximumf %9, %10 : vector<8x256xf32>
    %c0_11 = arith.constant 0 : index
    %c0_12 = arith.constant 0 : index
    %12 = vector.load %arg6[%c0_11, %c0_12] : memref<256x256xf32, #tpu.memory_space<vmem>>, vector<256x256xf32>
    %cst_13 = arith.constant dense<0.000000e+00> : vector<8x256xf32>
    %13 = tpu.matmul %11, %12, %cst_13 {dimension_numbers = #tpu.dot_dimension_numbers<[1], [0], [0], [1], [0, 0, 1, 1], [], []>} : vector<8x256xf32>, vector<256x256xf32>, vector<8x256xf32> -> vector<8x256xf32>
    %c0_14 = arith.constant 0 : index
    %c0_15 = arith.constant 0 : index
    %14 = vector.load %arg7[%c0_14, %c0_15] : memref<1x256xf32, #tpu.memory_space<vmem>>, vector<1x256xf32>
    %15 = vector.broadcast %14 : vector<1x256xf32> to vector<8x256xf32>
    %16 = arith.addf %13, %15 : vector<8x256xf32>
    %cst_16 = arith.constant 0.000000e+00 : f32
    %17 = vector.broadcast %cst_16 : f32 to vector<8x256xf32>
    %18 = arith.maximumf %16, %17 : vector<8x256xf32>
    %c0_17 = arith.constant 0 : index
    %c0_18 = arith.constant 0 : index
    %19 = vector.load %arg8[%c0_17, %c0_18] : memref<256x128xf32, #tpu.memory_space<vmem>>, vector<256x128xf32>
    %cst_19 = arith.constant dense<0.000000e+00> : vector<8x128xf32>
    %20 = tpu.matmul %18, %19, %cst_19 {dimension_numbers = #tpu.dot_dimension_numbers<[1], [0], [0], [1], [0, 0, 1, 1], [], []>} : vector<8x256xf32>, vector<256x128xf32>, vector<8x128xf32> -> vector<8x128xf32>
    %c0_20 = arith.constant 0 : index
    %c0_21 = arith.constant 0 : index
    %21 = vector.load %arg9[%c0_20, %c0_21] : memref<1x128xf32, #tpu.memory_space<vmem>>, vector<1x128xf32>
    %22 = vector.broadcast %21 : vector<1x128xf32> to vector<8x128xf32>
    %23 = arith.addf %20, %22 : vector<8x128xf32>
    %c0_22 = arith.constant 0 : index
    %c0_23 = arith.constant 0 : index
    %24 = vector.load %arg10[%c0_22, %c0_23] : memref<8x128xf32, #tpu.memory_space<vmem>>, vector<8x128xf32>
    tpu.vector_store %arg10[%c0_22, %c0_23], %23 {strides = array<i32>} : memref<8x128xf32, #tpu.memory_space<vmem>>, vector<8x128xf32>,
    return
  }
  func.func @transform_0(%arg0: i32) -> (i32, i32) {
    %c0_i32 = arith.constant 0 : i32
    %c0_i32_0 = arith.constant 0 : i32
    return %arg0, %c0_i32 : i32, i32
  }
  func.func @transform_1(%arg0: i32) -> (i32, i32) {
    %c0_i32 = arith.constant 0 : i32
    %c0_i32_0 = arith.constant 0 : i32
    return %arg0, %c0_i32 : i32, i32
  }
  func.func @transform_2(%arg0: i32) -> (i32, i32) {
    %c0_i32 = arith.constant 0 : i32
    %c0_i32_0 = arith.constant 0 : i32
    %c0_i32_1 = arith.constant 0 : i32
    return %c0_i32, %c0_i32_0 : i32, i32
  }
  func.func @transform_3(%arg0: i32) -> (i32, i32) {
    %c0_i32 = arith.constant 0 : i32
    %c0_i32_0 = arith.constant 0 : i32
    %c0_i32_1 = arith.constant 0 : i32
    return %c0_i32, %c0_i32_0 : i32, i32
  }
  func.func @transform_4(%arg0: i32) -> (i32, i32) {
    %c0_i32 = arith.constant 0 : i32
    %c0_i32_0 = arith.constant 0 : i32
    %c0_i32_1 = arith.constant 0 : i32
    return %c0_i32, %c0_i32_0 : i32, i32
  }
  func.func @transform_5(%arg0: i32) -> (i32, i32) {
    %c0_i32 = arith.constant 0 : i32
    %c0_i32_0 = arith.constant 0 : i32
    %c0_i32_1 = arith.constant 0 : i32
    return %c0_i32, %c0_i32_0 : i32, i32
  }
  func.func @transform_6(%arg0: i32) -> (i32, i32) {
    %c0_i32 = arith.constant 0 : i32
    %c0_i32_0 = arith.constant 0 : i32
    %c0_i32_1 = arith.constant 0 : i32
    return %c0_i32, %c0_i32_0 : i32, i32
  }
  func.func @transform_7(%arg0: i32) -> (i32, i32) {
    %c0_i32 = arith.constant 0 : i32
    %c0_i32_0 = arith.constant 0 : i32
    %c0_i32_1 = arith.constant 0 : i32
    return %c0_i32, %c0_i32_0 : i32, i32
  }
  func.func @transform_8(%arg0: i32) -> (i32, i32) {
    %c0_i32 = arith.constant 0 : i32
    %c0_i32_0 = arith.constant 0 : i32
    %c0_i32_1 = arith.constant 0 : i32
    return %c0_i32, %c0_i32_0 : i32, i32
  }
  func.func @transform_9(%arg0: i32) -> (i32, i32) {
    %c0_i32 = arith.constant 0 : i32
    %c0_i32_0 = arith.constant 0 : i32
    return %arg0, %c0_i32 : i32, i32
  }
}

</mosaic_0001>

<llo_original>
// kernel: critic_forward.1
$region0: #{critic_forward.1}
  #allocation0 [shape = 'u32[]', space=smem, size = 0x4, offset = 0x4, fixed_abs, tag = 'smem constant byte address 0x4 - core index']
  #allocation1 [shape = 'u32[72,128]{1,0:T(1,128)}', space=vmem, size = 0x9000, scoped, tag = 'internal scratch']
  %s0 = inlined_call_operand.vmem [shape: f32[8,16], index: 0, kind: input, shape index: {}]
  %s1 = inlined_call_operand.vmem [shape: f32[8,8], index: 1, kind: input, shape index: {}]
  %s2 = inlined_call_operand.vmem [shape: f32[16,256], index: 2, kind: input, shape index: {}]
  %s3 = inlined_call_operand.vmem [shape: f32[8,256], index: 3, kind: input, shape index: {}]
  %s4 = inlined_call_operand.vmem [shape: f32[1,256], index: 4, kind: input, shape index: {}]
  %s5 = inlined_call_operand.vmem [shape: f32[256,256], index: 5, kind: input, shape index: {}]
  %s6 = inlined_call_operand.vmem [shape: f32[1,256], index: 6, kind: input, shape index: {}]
  %s7 = inlined_call_operand.vmem [shape: f32[256,128], index: 7, kind: input, shape index: {}]
  %s8 = inlined_call_operand.vmem [shape: f32[1,128], index: 8, kind: input, shape index: {}]
  %s9 = inlined_call_operand.vmem [shape: f32[8,128], index: 9, kind: output, shape index: {}]
  %s10 = sld [smem:[#allocation0]]
  $region46: #{critic_forward.1} parent=0
    _
  %s12 = ssub.s32 1, %s10
  %s13 = scalar_select 0, %s12, %s10
  // Predicated region
  $region2: #{critic_forward.1} parent=0 // pred_check
    _
  $region3: #{critic_forward.1} parent=0 // pred_check_branch
    %15 = sbr.rel (0) target = $region5
  $region4: #{critic_forward.1} parent=0 // pred_region
    _
  $region5: #{critic_forward.1} parent=0 // pred_fallthru
    _
  // Predicated region
  $region6: #{critic_forward.1} parent=0 // pred_check
    _
  $region7: #{critic_forward.1} parent=0 // pred_check_branch
    %17 = sbr.rel (0) target = $region9
  $region8: #{critic_forward.1} parent=0 // pred_region
    _
  $region9: #{critic_forward.1} parent=0 // pred_fallthru
    _
  // Predicated region
  $region10: #{critic_forward.1} parent=0 // pred_check
    _
  $region11: #{critic_forward.1} parent=0 // pred_check_branch
    %19 = sbr.rel (0) target = $region13
  $region12: #{critic_forward.1} parent=0 // pred_region
    _
  $region13: #{critic_forward.1} parent=0 // pred_fallthru
    _
  // Predicated region
  $region14: #{critic_forward.1} parent=0 // pred_check
    _
  $region15: #{critic_forward.1} parent=0 // pred_check_branch
    %21 = sbr.rel (0) target = $region17
  $region16: #{critic_forward.1} parent=0 // pred_region
    _
  $region17: #{critic_forward.1} parent=0 // pred_fallthru
    _
  // Predicated region
  $region18: #{critic_forward.1} parent=0 // pred_check
    _
  $region19: #{critic_forward.1} parent=0 // pred_check_branch
    %23 = sbr.rel (0) target = $region21
  $region20: #{critic_forward.1} parent=0 // pred_region
    _
  $region21: #{critic_forward.1} parent=0 // pred_fallthru
    _
  // Predicated region
  $region22: #{critic_forward.1} parent=0 // pred_check
    _
  $region23: #{critic_forward.1} parent=0 // pred_check_branch
    %25 = sbr.rel (0) target = $region25
  $region24: #{critic_forward.1} parent=0 // pred_region
    _
  $region25: #{critic_forward.1} parent=0 // pred_fallthru
    _
  // Predicated region
  $region26: #{critic_forward.1} parent=0 // pred_check
    _
  $region27: #{critic_forward.1} parent=0 // pred_check_branch
    %27 = sbr.rel (0) target = $region29
  $region28: #{critic_forward.1} parent=0 // pred_region
    _
  $region29: #{critic_forward.1} parent=0 // pred_fallthru
    _
  // Predicated region
  $region30: #{critic_forward.1} parent=0 // pred_check
    _
  $region31: #{critic_forward.1} parent=0 // pred_check_branch
    %29 = sbr.rel (0) target = $region33
  $region32: #{critic_forward.1} parent=0 // pred_region
    _
  $region33: #{critic_forward.1} parent=0 // pred_fallthru
    _
  // Predicated region
  $region34: #{critic_forward.1} parent=0 // pred_check
    _
  $region35: #{critic_forward.1} parent=0 // pred_check_branch
    %31 = sbr.rel (0) target = $region37
  $region36: #{critic_forward.1} parent=0 // pred_region
    _
  $region37: #{critic_forward.1} parent=0 // pred_fallthru
    _
  %v32 = vld [vmem:[%s0] sm:$0xff]
  %v33 = vld [vmem:[%s2] sm:$0xff]
  %v34 = vld [vmem:[%s2 + $0x8] sm:$0xff]
  %v35 = vld [vmem:[%s2 + $0x10] sm:$0xff]
  %v36 = vld [vmem:[%s2 + $0x18] sm:$0xff]
  %v37 = vld [vmem:[%s1] sm:$0xff]
  %v38 = vld [vmem:[%s3] sm:$0xff]
  %v39 = vld [vmem:[%s3 + $0x8] sm:$0xff]
  %vm40 = vcmask 64512
  %v42 = vsel %vm40, %v37, 0
  %44 = vmatpush.msra.mxu0 0.0
  %45 = vmatpush.msra.mxu0 0.0
  %46 = vmatpush.msra.mxu0 0.0
  %47 = vmatpush.msra.mxu0 0.0
  %48 = vmatpush.msra.mxu0 0.0
  %49 = vmatpush.msra.mxu0 0.0
  %50 = vmatpush.msra.mxu0 0.0
  %51 = vmatpush.msra.mxu0 0.0
  %52 = vmatpush.msra.mxu0 0.0
  %53 = vmatpush.msra.mxu0 0.0
  %54 = vmatpush.msra.mxu0 0.0
  %55 = vmatpush.msra.mxu0 0.0
  %56 = vmatpush.msra.mxu0 0.0
  %57 = vmatpush.msra.mxu0 0.0
  %58 = vmatpush.msra.mxu0 0.0
  %59 = vmatpush.msra.mxu0 %v38
  %60 = vmatmul.f32.gmra.mxu0 %v42
  %v61 = vpop.f32.mrf.mxu0
  %v62 = vadd.f32 0.0, %v61
  %63 = vdwg.mxu0
  %64 = vmatpush.msra.mxu0 0.0
  %65 = vmatpush.msra.mxu0 0.0
  %66 = vmatpush.msra.mxu0 0.0
  %67 = vmatpush.msra.mxu0 0.0
  %68 = vmatpush.msra.mxu0 0.0
  %69 = vmatpush.msra.mxu0 0.0
  %70 = vmatpush.msra.mxu0 0.0
  %71 = vmatpush.msra.mxu0 0.0
  %72 = vmatpush.msra.mxu0 0.0
  %73 = vmatpush.msra.mxu0 0.0
  %74 = vmatpush.msra.mxu0 0.0
  %75 = vmatpush.msra.mxu0 0.0
  %76 = vmatpush.msra.mxu0 0.0
  %77 = vmatpush.msra.mxu0 0.0
  %78 = vmatpush.msra.mxu0 0.0
  %79 = vmatpush.msra.mxu0 %v39
  %80 = vmatmul.f32.gmra.mxu0 %v42
  %v81 = vpop.f32.mrf.mxu0
  %v82 = vadd.f32 0.0, %v81
  %83 = vdwg.mxu0
  %vm84 = vcmask 130048
  %v86 = vsel %vm84, %v32, 0
  %88 = vmatpush.msra.mxu0 0.0
  %89 = vmatpush.msra.mxu0 0.0
  %90 = vmatpush.msra.mxu0 0.0
  %91 = vmatpush.msra.mxu0 0.0
  %92 = vmatpush.msra.mxu0 0.0
  %93 = vmatpush.msra.mxu0 0.0
  %94 = vmatpush.msra.mxu0 0.0
  %95 = vmatpush.msra.mxu0 0.0
  %96 = vmatpush.msra.mxu0 0.0
  %97 = vmatpush.msra.mxu0 0.0
  %98 = vmatpush.msra.mxu0 0.0
  %99 = vmatpush.msra.mxu0 0.0
  %100 = vmatpush.msra.mxu0 0.0
  %101 = vmatpush.msra.mxu0 0.0
  %102 = vmatpush.msra.mxu0 %v35
  %103 = vmatpush.msra.mxu0 %v33
  %104 = vmatmul.f32.gmra.mxu0 %v86
  %v105 = vpop.f32.mrf.mxu0
  %v106 = vadd.f32 %v62, %v105
  %107 = vdwg.mxu0
  %108 = vmatpush.msra.mxu0 0.0
  %109 = vmatpush.msra.mxu0 0.0
  %110 = vmatpush.msra.mxu0 0.0
  %111 = vmatpush.msra.mxu0 0.0
  %112 = vmatpush.msra.mxu0 0.0
  %113 = vmatpush.msra.mxu0 0.0
  %114 = vmatpush.msra.mxu0 0.0
  %115 = vmatpush.msra.mxu0 0.0
  %116 = vmatpush.msra.mxu0 0.0
  %117 = vmatpush.msra.mxu0 0.0
  %118 = vmatpush.msra.mxu0 0.0
  %119 = vmatpush.msra.mxu0 0.0
  %120 = vmatpush.msra.mxu0 0.0
  %121 = vmatpush.msra.mxu0 0.0
  %122 = vmatpush.msra.mxu0 %v36
  %123 = vmatpush.msra.mxu0 %v34
  %124 = vmatmul.f32.gmra.mxu0 %v86
  %v125 = vpop.f32.mrf.mxu0
  %v126 = vadd.f32 %v82, %v125
  %127 = vdwg.mxu0
  %v128 = vld [vmem:[%s4] sm:$0x3]
  %v130 = vperm.slane %v128, 0
  %v131 = vperm.slane %v128, 1
  %v134 = vadd.f32 %v106, %v130
  %v135 = vadd.f32 %v126, %v131
  %v136 = vmax.f32 %v134, 0.0
  %v137 = vmax.f32 %v135, 0.0
  %v138 = vld [vmem:[%s5] sm:$0xff]
  %v139 = vld [vmem:[%s5 + $0x8] sm:$0xff]
  %v140 = vld [vmem:[%s5 + $0x10] sm:$0xff]
  %v141 = vld [vmem:[%s5 + $0x18] sm:$0xff]
  %v142 = vld [vmem:[%s5 + $0x20] sm:$0xff]
  %v143 = vld [vmem:[%s5 + $0x28] sm:$0xff]
  %v144 = vld [vmem:[%s5 + $0x30] sm:$0xff]
  %v145 = vld [vmem:[%s5 + $0x38] sm:$0xff]
  %v146 = vld [vmem:[%s5 + $0x40] sm:$0xff]
  %v147 = vld [vmem:[%s5 + $0x48] sm:$0xff]
  %v148 = vld [vmem:[%s5 + $0x50] sm:$0xff]
  %v149 = vld [vmem:[%s5 + $0x58] sm:$0xff]
  %v150 = vld [vmem:[%s5 + $0x60] sm:$0xff]
  %v151 = vld [vmem:[%s5 + $0x68] sm:$0xff]
  %v152 = vld [vmem:[%s5 + $0x70] sm:$0xff]
  %v153 = vld [vmem:[%s5 + $0x78] sm:$0xff]
  %v154 = vld [vmem:[%s5 + $0x80] sm:$0xff]
  %v155 = vld [vmem:[%s5 + $0x88] sm:$0xff]
  %v156 = vld [vmem:[%s5 + $0x90] sm:$0xff]
  %v157 = vld [vmem:[%s5 + $0x98] sm:$0xff]
  %v158 = vld [vmem:[%s5 + $0xa0] sm:$0xff]
  %v159 = vld [vmem:[%s5 + $0xa8] sm:$0xff]
  %v160 = vld [vmem:[%s5 + $0xb0] sm:$0xff]
  %v161 = vld [vmem:[%s5 + $0xb8] sm:$0xff]
  %v162 = vld [vmem:[%s5 + $0xc0] sm:$0xff]
  %v163 = vld [vmem:[%s5 + $0xc8] sm:$0xff]
  %v164 = vld [vmem:[%s5 + $0xd0] sm:$0xff]
  %v165 = vld [vmem:[%s5 + $0xd8] sm:$0xff]
  %v166 = vld [vmem:[%s5 + $0xe0] sm:$0xff]
  %v167 = vld [vmem:[%s5 + $0xe8] sm:$0xff]
  %v168 = vld [vmem:[%s5 + $0xf0] sm:$0xff]
  %v169 = vld [vmem:[%s5 + $0xf8] sm:$0xff]
  %v170 = vld [vmem:[%s5 + $0x100] sm:$0xff]
  %v171 = vld [vmem:[%s5 + $0x108] sm:$0xff]
  %v172 = vld [vmem:[%s5 + $0x110] sm:$0xff]
  %v173 = vld [vmem:[%s5 + $0x118] sm:$0xff]
  %v174 = vld [vmem:[%s5 + $0x120] sm:$0xff]
  %v175 = vld [vmem:[%s5 + $0x128] sm:$0xff]
  %v176 = vld [vmem:[%s5 + $0x130] sm:$0xff]
  %v177 = vld [vmem:[%s5 + $0x138] sm:$0xff]
  %v178 = vld [vmem:[%s5 + $0x140] sm:$0xff]
  %v179 = vld [vmem:[%s5 + $0x148] sm:$0xff]
  %v180 = vld [vmem:[%s5 + $0x150] sm:$0xff]
  %v181 = vld [vmem:[%s5 + $0x158] sm:$0xff]
  %v182 = vld [vmem:[%s5 + $0x160] sm:$0xff]
  %v183 = vld [vmem:[%s5 + $0x168] sm:$0xff]
  %v184 = vld [vmem:[%s5 + $0x170] sm:$0xff]
  %v185 = vld [vmem:[%s5 + $0x178] sm:$0xff]
  %v186 = vld [vmem:[%s5 + $0x180] sm:$0xff]
  %v187 = vld [vmem:[%s5 + $0x188] sm:$0xff]
  %v188 = vld [vmem:[%s5 + $0x190] sm:$0xff]
  %v189 = vld [vmem:[%s5 + $0x198] sm:$0xff]
  %v190 = vld [vmem:[%s5 + $0x1a0] sm:$0xff]
  %v191 = vld [vmem:[%s5 + $0x1a8] sm:$0xff]
  %v192 = vld [vmem:[%s5 + $0x1b0] sm:$0xff]
  %v193 = vld [vmem:[%s5 + $0x1b8] sm:$0xff]
  %v194 = vld [vmem:[%s5 + $0x1c0] sm:$0xff]
  %v195 = vld [vmem:[%s5 + $0x1c8] sm:$0xff]
  %v196 = vld [vmem:[%s5 + $0x1d0] sm:$0xff]
  %v197 = vld [vmem:[%s5 + $0x1d8] sm:$0xff]
  %v198 = vld [vmem:[%s5 + $0x1e0] sm:$0xff]
  %v199 = vld [vmem:[%s5 + $0x1e8] sm:$0xff]
  %v200 = vld [vmem:[%s5 + $0x1f0] sm:$0xff]
  %v201 = vld [vmem:[%s5 + $0x1f8] sm:$0xff]
  %v202 = vld [vmem:[%s6] sm:$0x3]
  %v204 = vperm.slane %v202, 0
  %v205 = vperm.slane %v202, 1
  %208 = vmatpush.msra.mxu0 %v168
  %209 = vmatpush.msra.mxu0 %v166
  %210 = vmatpush.msra.mxu0 %v164
  %211 = vmatpush.msra.mxu0 %v162
  %212 = vmatpush.msra.mxu0 %v160
  %213 = vmatpush.msra.mxu0 %v158
  %214 = vmatpush.msra.mxu0 %v156
  %215 = vmatpush.msra.mxu0 %v154
  %216 = vmatpush.msra.mxu0 %v152
  %217 = vmatpush.msra.mxu0 %v150
  %218 = vmatpush.msra.mxu0 %v148
  %219 = vmatpush.msra.mxu0 %v146
  %220 = vmatpush.msra.mxu0 %v144
  %221 = vmatpush.msra.mxu0 %v142
  %222 = vmatpush.msra.mxu0 %v140
  %223 = vmatpush.msra.mxu0 %v138
  %224 = vmatmul.f32.gmra.mxu0 %v136
  %v225 = vpop.f32.mrf.mxu0
  %v226 = vadd.f32 %v204, %v225
  %227 = vdwg.mxu0
  %228 = vmatpush.msra.mxu0 %v200
  %229 = vmatpush.msra.mxu0 %v198
  %230 = vmatpush.msra.mxu0 %v196
  %231 = vmatpush.msra.mxu0 %v194
  %232 = vmatpush.msra.mxu0 %v192
  %233 = vmatpush.msra.mxu0 %v190
  %234 = vmatpush.msra.mxu0 %v188
  %235 = vmatpush.msra.mxu0 %v186
  %236 = vmatpush.msra.mxu0 %v184
  %237 = vmatpush.msra.mxu0 %v182
  %238 = vmatpush.msra.mxu0 %v180
  %239 = vmatpush.msra.mxu0 %v178
  %240 = vmatpush.msra.mxu0 %v176
  %241 = vmatpush.msra.mxu0 %v174
  %242 = vmatpush.msra.mxu0 %v172
  %243 = vmatpush.msra.mxu0 %v170
  %244 = vmatmul.f32.gmra.mxu0 %v137
  %v245 = vpop.f32.mrf.mxu0
  %v246 = vadd.f32 %v226, %v245
  %247 = vdwg.mxu0
  %248 = vmatpush.msra.mxu0 %v169
  %249 = vmatpush.msra.mxu0 %v167
  %250 = vmatpush.msra.mxu0 %v165
  %251 = vmatpush.msra.mxu0 %v163
  %252 = vmatpush.msra.mxu0 %v161
  %253 = vmatpush.msra.mxu0 %v159
  %254 = vmatpush.msra.mxu0 %v157
  %255 = vmatpush.msra.mxu0 %v155
  %256 = vmatpush.msra.mxu0 %v153
  %257 = vmatpush.msra.mxu0 %v151
  %258 = vmatpush.msra.mxu0 %v149
  %259 = vmatpush.msra.mxu0 %v147
  %260 = vmatpush.msra.mxu0 %v145
  %261 = vmatpush.msra.mxu0 %v143
  %262 = vmatpush.msra.mxu0 %v141
  %263 = vmatpush.msra.mxu0 %v139
  %264 = vmatmul.f32.gmra.mxu0 %v136
  %v265 = vpop.f32.mrf.mxu0
  %v266 = vadd.f32 %v205, %v265
  %267 = vdwg.mxu0
  %268 = vmatpush.msra.mxu0 %v201
  %269 = vmatpush.msra.mxu0 %v199
  %270 = vmatpush.msra.mxu0 %v197
  %271 = vmatpush.msra.mxu0 %v195
  %272 = vmatpush.msra.mxu0 %v193
  %273 = vmatpush.msra.mxu0 %v191
  %274 = vmatpush.msra.mxu0 %v189
  %275 = vmatpush.msra.mxu0 %v187
  %276 = vmatpush.msra.mxu0 %v185
  %277 = vmatpush.msra.mxu0 %v183
  %278 = vmatpush.msra.mxu0 %v181
  %279 = vmatpush.msra.mxu0 %v179
  %280 = vmatpush.msra.mxu0 %v177
  %281 = vmatpush.msra.mxu0 %v175
  %282 = vmatpush.msra.mxu0 %v173
  %283 = vmatpush.msra.mxu0 %v171
  %284 = vmatmul.f32.gmra.mxu0 %v137
  %v285 = vpop.f32.mrf.mxu0
  %v286 = vadd.f32 %v266, %v285
  %287 = vdwg.mxu0
  %v288 = vmax.f32 %v246, 0.0
  %v289 = vmax.f32 %v286, 0.0
  %v290 = vld [vmem:[%s7] sm:$0xff]
  %v291 = vld [vmem:[%s7 + $0x8] sm:$0xff]
  %v292 = vld [vmem:[%s7 + $0x10] sm:$0xff]
  %v293 = vld [vmem:[%s7 + $0x18] sm:$0xff]
  %v294 = vld [vmem:[%s7 + $0x20] sm:$0xff]
  %v295 = vld [vmem:[%s7 + $0x28] sm:$0xff]
  %v296 = vld [vmem:[%s7 + $0x30] sm:$0xff]
  %v297 = vld [vmem:[%s7 + $0x38] sm:$0xff]
  %v298 = vld [vmem:[%s7 + $0x40] sm:$0xff]
  %v299 = vld [vmem:[%s7 + $0x48] sm:$0xff]
  %v300 = vld [vmem:[%s7 + $0x50] sm:$0xff]
  %v301 = vld [vmem:[%s7 + $0x58] sm:$0xff]
  %v302 = vld [vmem:[%s7 + $0x60] sm:$0xff]
  %v303 = vld [vmem:[%s7 + $0x68] sm:$0xff]
  %v304 = vld [vmem:[%s7 + $0x70] sm:$0xff]
  %v305 = vld [vmem:[%s7 + $0x78] sm:$0xff]
  %v306 = vld [vmem:[%s7 + $0x80] sm:$0xff]
  %v307 = vld [vmem:[%s7 + $0x88] sm:$0xff]
  %v308 = vld [vmem:[%s7 + $0x90] sm:$0xff]
  %v309 = vld [vmem:[%s7 + $0x98] sm:$0xff]
  %v310 = vld [vmem:[%s7 + $0xa0] sm:$0xff]
  %v311 = vld [vmem:[%s7 + $0xa8] sm:$0xff]
  %v312 = vld [vmem:[%s7 + $0xb0] sm:$0xff]
  %v313 = vld [vmem:[%s7 + $0xb8] sm:$0xff]
  %v314 = vld [vmem:[%s7 + $0xc0] sm:$0xff]
  %v315 = vld [vmem:[%s7 + $0xc8] sm:$0xff]
  %v316 = vld [vmem:[%s7 + $0xd0] sm:$0xff]
  %v317 = vld [vmem:[%s7 + $0xd8] sm:$0xff]
  %v318 = vld [vmem:[%s7 + $0xe0] sm:$0xff]
  %v319 = vld [vmem:[%s7 + $0xe8] sm:$0xff]
  %v320 = vld [vmem:[%s7 + $0xf0] sm:$0xff]
  %v321 = vld [vmem:[%s7 + $0xf8] sm:$0xff]
  %v322 = vld [vmem:[%s8] sm:$0x1]
  %v324 = vperm.slane %v322, 0
  %326 = vmatpush.msra.mxu0 %v305
  %327 = vmatpush.msra.mxu0 %v304
  %328 = vmatpush.msra.mxu0 %v303
  %329 = vmatpush.msra.mxu0 %v302
  %330 = vmatpush.msra.mxu0 %v301
  %331 = vmatpush.msra.mxu0 %v300
  %332 = vmatpush.msra.mxu0 %v299
  %333 = vmatpush.msra.mxu0 %v298
  %334 = vmatpush.msra.mxu0 %v297
  %335 = vmatpush.msra.mxu0 %v296
  %336 = vmatpush.msra.mxu0 %v295
  %337 = vmatpush.msra.mxu0 %v294
  %338 = vmatpush.msra.mxu0 %v293
  %339 = vmatpush.msra.mxu0 %v292
  %340 = vmatpush.msra.mxu0 %v291
  %341 = vmatpush.msra.mxu0 %v290
  %342 = vmatmul.f32.gmra.mxu0 %v288
  %v343 = vpop.f32.mrf.mxu0
  %v344 = vadd.f32 %v324, %v343
  %345 = vdwg.mxu0
  %346 = vmatpush.msra.mxu0 %v321
  %347 = vmatpush.msra.mxu0 %v320
  %348 = vmatpush.msra.mxu0 %v319
  %349 = vmatpush.msra.mxu0 %v318
  %350 = vmatpush.msra.mxu0 %v317
  %351 = vmatpush.msra.mxu0 %v316
  %352 = vmatpush.msra.mxu0 %v315
  %353 = vmatpush.msra.mxu0 %v314
  %354 = vmatpush.msra.mxu0 %v313
  %355 = vmatpush.msra.mxu0 %v312
  %356 = vmatpush.msra.mxu0 %v311
  %357 = vmatpush.msra.mxu0 %v310
  %358 = vmatpush.msra.mxu0 %v309
  %359 = vmatpush.msra.mxu0 %v308
  %360 = vmatpush.msra.mxu0 %v307
  %361 = vmatpush.msra.mxu0 %v306
  %362 = vmatmul.f32.gmra.mxu0 %v289
  %v363 = vpop.f32.mrf.mxu0
  %v364 = vadd.f32 %v344, %v363
  %365 = vdwg.mxu0
  %366 = vst [vmem:[%s9] sm:$0xff] %v364
  // Predicated region
  $region38: #{critic_forward.1} parent=0 // pred_check
    _
  $region39: #{critic_forward.1} parent=0 // pred_check_branch
    %368 = sbr.rel (0) target = $region41
  $region40: #{critic_forward.1} parent=0 // pred_region
    _
  $region41: #{critic_forward.1} parent=0 // pred_fallthru
    _
  // Predicated region
  $region42: #{critic_forward.1} parent=0 // pred_check
    _
  $region43: #{critic_forward.1} parent=0 // pred_check_branch
    %370 = sbr.rel (0) target = $region45
  $region44: #{critic_forward.1} parent=0 // pred_region
    _
  $region45: #{critic_forward.1} parent=0 // pred_fallthru
    _

</llo_original>
